<compile_context>
chip_gen: v5e
topology: v5e:2x2
jax: 0.10.0
libtpu: 0.0.40
codegen_flags: <defaults>
</compile_context>

<pallas_src>
import functools

import jax
import jax.numpy as jnp
from jax.experimental import pallas as pl
from jax.experimental.pallas import tpu as pltpu


# ----------------------------------------------------------------------------
# Kernel
# ----------------------------------------------------------------------------
def _msce_kernel(sl_ref, logits_ref, labels_ref, out_ref, *, n_points, need_mask):
    """One (sample i, N-tile j) per grid step.

    logits_ref : [1, 1, C, TN]  selected shape's logits for sample i, tile j
    labels_ref : [1, 1, TN]     labels for sample i, tile j
    out_ref    : [1, 1, 128]    tile partial CE sum, broadcast over the 128 lanes
    """
    x = logits_ref[0, 0].astype(jnp.float32)                 # [C, TN]
    lbl = labels_ref[0]                                      # [1, TN] int32
    tn = x.shape[1]

    # log-sum-exp over the class (sublane) axis; reuse (x - m) for the gather so the
    # `m` term cancels and one [C, TN] temporary + 2 VALU ops/elem are saved.
    m = jnp.max(x, axis=0, keepdims=True)                    # [1, TN]
    xm = x - m                                               # [C, TN]
    lse = jnp.log(jnp.sum(jnp.exp(xm), axis=0, keepdims=True))   # [1, TN]

    # (x - m)[label[n], n] via a masked reduce (no one-hot materialization).
    cls_iota = jax.lax.broadcasted_iota(jnp.int32, x.shape, 0)   # [C, TN]
    xm_lbl = jnp.sum(jnp.where(cls_iota == lbl, xm, 0.0),
                     axis=0, keepdims=True)                   # [1, TN]

    ce = lse - xm_lbl                                         # per-point cross-entropy

    if need_mask:  # static: only when the last tile spills past the true N
        lane = jax.lax.broadcasted_iota(jnp.int32, ce.shape, 1)
        valid = (pl.program_id(1) * tn + lane) < n_points
        ce = jnp.where(valid, ce, 0.0)

    # Tile partial sum (cross-lane reduce on the XLU slot, which has slack in a
    # mem-bound kernel), broadcast across the 128-lane output block.
    out_ref[...] = jnp.broadcast_to(jnp.sum(ce), out_ref.shape)
    # NOTE: PyTorch's `0.0 * logits_all_shapes[isl][i].sum()` terms are zero in the
    # forward value and are omitted.  Forward-only (no custom VJP).


# ----------------------------------------------------------------------------
# Wrapper
# ----------------------------------------------------------------------------
def _physical_vmem_bytes():
    try:
        return int(pltpu.get_tpu_info().vmem_capacity_bytes)
    except Exception:
        return 64 * 1024 * 1024          # conservative fallback (v7x per-TC VMEM)


def _choose_n_tile(N, C, itemsize, budget_bytes):
    """Largest multiple-of-128 point tile whose per-step VMEM footprint
    (2x double-buffered [C, tn] logits DMA blocks + ~4x f32 [C, tn] in-kernel
    temporaries + 2x [tn] int32 label buffers) fits the budget."""
    if N <= 128:
        return N                          # single full-extent tile per sample
    per_point = 2 * C * itemsize + 4 * C * 4 + 2 * 4
    tn_max = max(128, (budget_bytes // per_point) // 128 * 128)
    if N % 128 == 0:
        return min(tn_max, N)
    return min(tn_max, (N // 128) * 128)  # last tile handled via cdiv grid + lane mask


def multi_shape_cross_entropy(logits_stacked, points_labels, shape_labels, *,
                              n_tile=None):
    """logits_stacked: [S, B, C, N] f32/bf16; points_labels: [B, N] int;
    shape_labels: [B] int. Returns the scalar loss (f32)."""
    S, B, C, N = logits_stacked.shape
    points_labels = points_labels.astype(jnp.int32)
    shape_labels = shape_labels.astype(jnp.int32)
    itemsize = jnp.dtype(logits_stacked.dtype).itemsize

    phys_vmem = _physical_vmem_bytes()
    # ~5/8 of physical VMEM for pipeline buffers + temporaries (≈40 MiB on v7x,
    # ≈80 MiB on v5e/v6e); vmem_limit raised explicitly above the scoped default.
    if n_tile is None:
        tn = _choose_n_tile(N, C, itemsize, (phys_vmem * 5) // 8)
    else:
        tn = _choose_n_tile(N, C, itemsize,
                            max(128, int(n_tile)) * (2 * C * itemsize + 4 * C * 4 + 8))
    nt = pl.cdiv(N, tn)
    vmem_limit = int(min((phys_vmem * 7) // 8, 112 * 1024 * 1024))

    kernel = functools.partial(_msce_kernel, n_points=N, need_mask=(nt * tn != N))

    grid_spec = pltpu.PrefetchScalarGridSpec(
        num_scalar_prefetch=1,                 # shape_labels -> SMEM, drives index_map
        grid=(B, nt),
        in_specs=[
            # DMA-gather the (shape_labels[i], i)-th logits slab, j-th N tile.
            pl.BlockSpec((1, 1, C, tn), lambda i, j, sl: (sl[i], i, 0, j)),
            pl.BlockSpec((1, 1, tn), lambda i, j, sl: (i, 0, j)),
        ],
        out_specs=pl.BlockSpec((1, 1, 128), lambda i, j, sl: (i, 0, j)),
    )
    partials = pl.pallas_call(
        kernel,
        out_shape=jax.ShapeDtypeStruct((B, 1, nt * 128), jnp.float32),
        grid_spec=grid_spec,
        compiler_params=pltpu.CompilerParams(
            # every (i, j) writes its own output block -> fully parallel grid
            dimension_semantics=("parallel", "parallel"),
            vmem_limit_bytes=vmem_limit,
        ),
    )(shape_labels, logits_stacked, points_labels.reshape(B, 1, N))

    # Each step broadcast its tile partial over 128 lanes; undo that factor, then
    # per-sample mean over N points and mean over the batch.
    return jnp.sum(partials) / (128.0 * N * B)


# ----------------------------------------------------------------------------
# Reference + test
# ----------------------------------------------------------------------------
def _reference(logits_stacked, points_labels, shape_labels):
    S, B, C, N = logits_stacked.shape
    sel = logits_stacked[shape_labels, jnp.arange(B)]          # [B, C, N]
    logp = jax.nn.log_softmax(sel.astype(jnp.float32), axis=1)
    ll = jnp.take_along_axis(logp, points_labels[:, None, :], axis=1)[:, 0, :]
    return (-ll.mean(axis=1)).sum() / B


def _make_inputs(key, num_shapes, B, C, N):
    k1, k2, k3 = jax.random.split(key, 3)
    logits_list = [
        jax.random.normal(jax.random.fold_in(k1, s), (B, C, N), dtype=jnp.float32)
        for s in range(num_shapes)
    ]
    logits_stacked = jnp.stack(logits_list, axis=0)                    # [S, B, C, N]
    points_labels = jax.random.randint(k2, (B, N), 0, C, dtype=jnp.int32)
    shape_labels = jax.random.randint(k3, (B,), 0, num_shapes, dtype=jnp.int32)
    return logits_stacked, points_labels, shape_labels


if __name__ == "__main__":
    key = jax.random.PRNGKey(0)
    num_shapes = 4       # == num_classes of the module (len(logits_all_shapes))
    B, C, N = 2, 8, 128  # batch, per-point classes, points

    # Case 1: N a multiple of 128 (no boundary masking).
    logits_stacked, points_labels, shape_labels = _make_inputs(key, num_shapes, B, C, N)
    loss = jax.block_until_ready(
        multi_shape_cross_entropy(logits_stacked, points_labels, shape_labels))
    ref = _reference(logits_stacked, points_labels, shape_labels)
    assert jnp.allclose(loss, ref, atol=1e-4, rtol=1e-4), (loss, ref)

    # Case 2: awkward N (not a multiple of 128) -> cdiv grid + in-kernel lane mask.
    N2 = 160
    logits2, labels2, shapes2 = _make_inputs(jax.random.PRNGKey(1), num_shapes, B, C, N2)
    loss2 = jax.block_until_ready(
        multi_shape_cross_entropy(logits2, labels2, shapes2))
    ref2 = _reference(logits2, labels2, shapes2)
    assert jnp.allclose(loss2, ref2, atol=1e-4, rtol=1e-4), (loss2, ref2)

    print("KERNEL_OK")
</pallas_src>

<mosaic_0001>
module attributes {stable_mosaic.version = 11 : i64} {
  func.func @_msce_kernel(%arg0: i32, %arg1: i32, %arg2: memref<2xi32, #tpu.memory_space<smem>>, %arg3: memref<1x1x8x128xf32, #tpu.memory_space<vmem>>, %arg4: memref<1x1x128xi32, #tpu.memory_space<vmem>>, %arg5: memref<1x1x128xf32, #tpu.memory_space<vmem>>) attributes {dimension_semantics = [#tpu.dimension_semantics<parallel>, #tpu.dimension_semantics<parallel>], iteration_bounds = array<i64: 2, 1>, scalar_prefetch = 1 : i64, scratch_operands = 0 : i64, tpu.core_type = #tpu.core_type<tc>, window_params = [{transform_indices = @transform_0, window_bounds = array<i64: 1, 1, 8, 128>}, {transform_indices = @transform_1, window_bounds = array<i64: 1, 1, 128>}, {transform_indices = @transform_2, window_bounds = array<i64: 1, 1, 128>}]} {
    %c0 = arith.constant 0 : index
    %c0_0 = arith.constant 0 : index
    %c0_1 = arith.constant 0 : index
    %c0_2 = arith.constant 0 : index
    %0 = vector.load %arg3[%c0, %c0_0, %c0_1, %c0_2] : memref<1x1x8x128xf32, #tpu.memory_space<vmem>>, vector<1x1x8x128xf32>
    %1 = vector.shape_cast %0 : vector<1x1x8x128xf32> to vector<8x128xf32>
    %c0_3 = arith.constant 0 : index
    %c0_4 = arith.constant 0 : index
    %c0_5 = arith.constant 0 : index
    %2 = vector.load %arg4[%c0_3, %c0_4, %c0_5] : memref<1x1x128xi32, #tpu.memory_space<vmem>>, vector<1x1x128xi32>
    %3 = vector.shape_cast %2 : vector<1x1x128xi32> to vector<1x128xi32>
    %cst = arith.constant dense<0xFF800000> : vector<128xf32>
    %4 = vector.multi_reduction <maximumf>, %1, %cst [0] : vector<8x128xf32> to vector<128xf32>
    %5 = vector.shape_cast %4 : vector<128xf32> to vector<1x128xf32>
    %6 = vector.broadcast %5 : vector<1x128xf32> to vector<8x128xf32>
    %7 = arith.subf %1, %6 : vector<8x128xf32>
    %8 = math.exp %7 : vector<8x128xf32>
    %cst_6 = arith.constant dense<0.000000e+00> : vector<128xf32>
    %9 = vector.multi_reduction <add>, %8, %cst_6 [0] : vector<8x128xf32> to vector<128xf32>
    %10 = vector.shape_cast %9 : vector<128xf32> to vector<1x128xf32>
    %11 = math.log %10 : vector<1x128xf32>
    %12 = tpu.iota {dimensions = array<i32: 0>} : vector<8x128xi32>
    %13 = vector.broadcast %3 : vector<1x128xi32> to vector<8x128xi32>
    %14 = arith.cmpi eq, %12, %13 : vector<8x128xi32>
    %cst_7 = arith.constant 0.000000e+00 : f32
    %15 = vector.broadcast %cst_7 : f32 to vector<8x128xf32>
    %16 = arith.select %14, %7, %15 : vector<8x128xi1>, vector<8x128xf32>
    %cst_8 = arith.constant dense<0.000000e+00> : vector<128xf32>
    %17 = vector.multi_reduction <add>, %16, %cst_8 [0] : vector<8x128xf32> to vector<128xf32>
    %18 = vector.shape_cast %17 : vector<128xf32> to vector<1x128xf32>
    %19 = arith.subf %11, %18 : vector<1x128xf32>
    %20 = vector.shape_cast %19 : vector<1x128xf32> to vector<1x1x128xf32>
    %cst_9 = arith.constant dense<0.000000e+00> : vector<1xf32>
    %21 = vector.multi_reduction <add>, %20, %cst_9 [1, 2] : vector<1x1x128xf32> to vector<1xf32>
    %22 = vector.shape_cast %21 : vector<1xf32> to vector<1x1x1xf32>
    %23 = vector.extract %22[0, 0, 0] : f32 from vector<1x1x1xf32>
    %24 = vector.broadcast %23 : f32 to vector<1x1x128xf32>
    %c0_10 = arith.constant 0 : index
    %c0_11 = arith.constant 0 : index
    %c0_12 = arith.constant 0 : index
    %25 = vector.load %arg5[%c0_10, %c0_11, %c0_12] : memref<1x1x128xf32, #tpu.memory_space<vmem>>, vector<1x1x128xf32>
    tpu.vector_store %arg5[%c0_10, %c0_11, %c0_12], %24 {strides = array<i32>} : memref<1x1x128xf32, #tpu.memory_space<vmem>>, vector<1x1x128xf32>,
    return
  }
  func.func @transform_0(%arg0: i32, %arg1: i32, %arg2: memref<2xi32, #tpu.memory_space<smem>>) -> (i32, i32, i32, i32) {
    %0 = arith.index_cast %arg0 : i32 to index
    %1 = memref.load %arg2[%0] : memref<2xi32, #tpu.memory_space<smem>>
    %c0_i32 = arith.constant 0 : i32
    %c0_i32_0 = arith.constant 0 : i32
    return %1, %arg0, %c0_i32, %arg1 : i32, i32, i32, i32
  }
  func.func @transform_1(%arg0: i32, %arg1: i32, %arg2: memref<2xi32, #tpu.memory_space<smem>>) -> (i32, i32, i32) {
    %c0_i32 = arith.constant 0 : i32
    %c0_i32_0 = arith.constant 0 : i32
    return %arg0, %c0_i32, %arg1 : i32, i32, i32
  }
  func.func @transform_2(%arg0: i32, %arg1: i32, %arg2: memref<2xi32, #tpu.memory_space<smem>>) -> (i32, i32, i32) {
    %c0_i32 = arith.constant 0 : i32
    %c0_i32_0 = arith.constant 0 : i32
    return %arg0, %c0_i32, %arg1 : i32, i32, i32
  }
}

</mosaic_0001>

<llo_original>
// kernel: tpu_custom_call.1
$region0: #{tpu_custom_call.1}
  #allocation0 [shape = 'u32[]', space=smem, size = 0x4, offset = 0x4, fixed_abs, tag = 'smem constant byte address 0x4 - core index']
  #allocation1 [shape = 'u32[72,128]{1,0:T(1,128)}', space=vmem, size = 0x9000, scoped, tag = 'internal scratch']
  #allocation2 [shape = 's32[1]{0}', space=sflag, size = 0x4, scoped, tag = 'scoped memory for tpu_custom_call.1']
  #allocation3 [shape = 'u8[512]{0}', space=smem, size = 0x200, scoped, tag = 'prefetched SMEM operand 0']
  %s0 = inlined_call_operand.hbm [shape: s32[2], index: 0, kind: input, shape index: {}]
  %s1 = inlined_call_operand.hbm [shape: f32[4,2,8,128], index: 1, kind: input, shape index: {}]
  %s2 = inlined_call_operand.hbm [shape: s32[2,1,128], index: 2, kind: input, shape index: {}]
  %s3 = inlined_call_operand.hbm [shape: f32[2,1,128], index: 3, kind: output, shape index: {}]
  %s4 = sld [smem:[#allocation0]]
  $region49: #{tpu_custom_call.1} parent=0
    _
  %s6 = ssub.s32 1, %s4
  %s7 = scalar_select 0, %s6, %s4
  %s9 = sshll.u32 %s0, 4
  %s10 = int_to_ptr.hbm [resolvable:$true] %s9
  %12 = dma.hbm_to_smem %s10, 16, [#allocation3], [#allocation2]
  %14 = dma.done [#allocation2], 16
  %15 = sfence
  $region1: #{tpu_custom_call.1} parent=0
    #allocation4 [shape = 'u8[8192]{0}', space=vmem, size = 0x2000, scoped, tag = 'input window, operand 1']
    #allocation5 [shape = 's32[2]{0}', space=sflag, size = 0x8, scoped, tag = 'scoped memory for tpu_custom_call.1']
    #allocation6 [shape = 's32[2]{0}', space=sflag, size = 0x8, scoped, tag = 'scoped memory for tpu_custom_call.1']
    #allocation7 [shape = 'u8[1024]{0}', space=vmem, size = 0x400, scoped, tag = 'input window, operand 2']
    #allocation8 [shape = 's32[2]{0}', space=sflag, size = 0x8, scoped, tag = 'scoped memory for tpu_custom_call.1']
    #allocation9 [shape = 'u8[1024]{0}', space=vmem, size = 0x400, scoped, tag = 'output window, operand 0']
    %16 = vsyncpa [#allocation5], 0
    %s17 = scalar_lea.sflag [#allocation5], 1
    %18 = vsyncpa %s17, 0
    %19 = vsyncpa [#allocation8], 0
    %s20 = scalar_lea.sflag [#allocation8], 1
    %21 = vsyncpa %s20, 0
    %22 = vsyncpa [#allocation6], 0
    %s23 = scalar_lea.sflag [#allocation6], 1
    %24 = vsyncpa %s23, 0
    loop: start=0, step=1, limit=4
    $region2: #{tpu_custom_call.1} parent=1 // loop_pre_header
      _
    $region3: #{tpu_custom_call.1} parent=1 // loop_header
      %s26 = sphi 0, %s30
      %p27 = scmp.ge.s32.totalorder %s26, 4
      %s33 = sphi 0, %s45
      %s34 = sphi 0, %s41
      %s35 = sphi 0, %s33
      %s36 = sphi 0, %s34
      %s37 = sphi 0, %s35
      %s38 = sphi 0, %s36
      %s54 = sphi 0, %s56
      %s57 = sphi 0, %s54
      %s58 = sphi 0, %s57
      %s74 = sphi 0, %s58
      %s82 = sphi 0, %s84
      %s85 = sphi 0, %s82
      %s86 = sphi 0, %s85
      %s102 = sphi 0, %s86
      %s110 = sphi 0, %s112
      %s113 = sphi 0, %s110
      %s114 = sphi 0, %s113
      %s130 = sphi 0, %s114
    $region4: #{tpu_custom_call.1} parent=1 // loop_header_branch
      %29 = sbr.rel (%p27) target = $region8
    $region5: #{tpu_custom_call.1} parent=1 // loop_body
      %s31 = ssub.s32 %s26, 1
      %s32 = ssub.s32 %s26, 2
      %s39 = sadd.s32 1, %s34
      %p40 = scmp.ge.s32.totalorder %s39, 1
      %s41 = scalar_select %p40, 0, %s39
      %s42 = sadd.s32 1, %s33
      %s43 = scalar_select %p40, %s42, %s33
      %p44 = scmp.ge.s32.totalorder %s43, 2
      %s45 = scalar_select %p44, 0, %s43
      %s46 = sld [smem:[#allocation3 + %s33]]
      %s47 = sld [smem:[#allocation3 + %s45]]
      %s48 = ssub.s32 %s46, %s47
      %s49 = ssub.s32 %s33, %s45
      %s50 = sor.u32 %s48, %s49
      %s51 = ssub.s32 %s34, %s41
      %s52 = sor.u32 %s50, %s51
      %p53 = scmp.eq.s32.totalorder %s52, 0
      %s55 = sadd.s32 %s54, 1
      %s56 = scalar_select %p53, %s54, %s55
      %p59 = pneg %p53
      %p60 = scmp.eq.s32.totalorder %s26, 1
      %p61 = por %p59, %p60
      %p62 = scmp.ne.s32.totalorder %s54, %s57
      %p63 = scmp.eq.s32.totalorder %s26, 0
      %p64 = por %p62, %p63
      %p65 = scmp.ne.s32.totalorder %s54, %s57
      %p66 = scmp.eq.s32.totalorder %s31, 1
      %p67 = por %p65, %p66
      %p68 = scmp.ne.s32.totalorder %s57, %s58
      %p69 = scmp.eq.s32.totalorder %s31, 0
      %p70 = por %p68, %p69
      %p71 = scmp.ne.s32.totalorder %s57, %s58
      %p72 = scmp.eq.s32.totalorder %s32, 1
      %p73 = por %p71, %p72
      %p75 = scmp.ne.s32.totalorder %s58, %s74
      %p76 = scmp.eq.s32.totalorder %s32, 0
      %p77 = por %p75, %p76
      %s78 = ssub.s32 %s33, %s45
      %s79 = ssub.s32 %s34, %s41
      %s80 = sor.u32 %s78, %s79
      %p81 = scmp.eq.s32.totalorder %s80, 0
      %s83 = sadd.s32 %s82, 1
      %s84 = scalar_select %p81, %s82, %s83
      %p87 = pneg %p81
      %p88 = scmp.eq.s32.totalorder %s26, 1
      %p89 = por %p87, %p88
      %p90 = scmp.ne.s32.totalorder %s82, %s85
      %p91 = scmp.eq.s32.totalorder %s26, 0
      %p92 = por %p90, %p91
      %p93 = scmp.ne.s32.totalorder %s82, %s85
      %p94 = scmp.eq.s32.totalorder %s31, 1
      %p95 = por %p93, %p94
      %p96 = scmp.ne.s32.totalorder %s85, %s86
      %p97 = scmp.eq.s32.totalorder %s31, 0
      %p98 = por %p96, %p97
      %p99 = scmp.ne.s32.totalorder %s85, %s86
      %p100 = scmp.eq.s32.totalorder %s32, 1
      %p101 = por %p99, %p100
      %p103 = scmp.ne.s32.totalorder %s86, %s102
      %p104 = scmp.eq.s32.totalorder %s32, 0
      %p105 = por %p103, %p104
      %s106 = ssub.s32 %s33, %s45
      %s107 = ssub.s32 %s34, %s41
      %s108 = sor.u32 %s106, %s107
      %p109 = scmp.eq.s32.totalorder %s108, 0
      %s111 = sadd.s32 %s110, 1
      %s112 = scalar_select %p109, %s110, %s111
      %p115 = pneg %p109
      %p116 = scmp.eq.s32.totalorder %s26, 1
      %p117 = por %p115, %p116
      %p118 = scmp.ne.s32.totalorder %s110, %s113
      %p119 = scmp.eq.s32.totalorder %s26, 0
      %p120 = por %p118, %p119
      %p121 = scmp.ne.s32.totalorder %s110, %s113
      %p122 = scmp.eq.s32.totalorder %s31, 1
      %p123 = por %p121, %p122
      %p124 = scmp.ne.s32.totalorder %s113, %s114
      %p125 = scmp.eq.s32.totalorder %s31, 0
      %p126 = por %p124, %p125
      %p127 = scmp.ne.s32.totalorder %s113, %s114
      %p128 = scmp.eq.s32.totalorder %s32, 1
      %p129 = por %p127, %p128
      %p131 = scmp.ne.s32.totalorder %s114, %s130
      %p132 = scmp.eq.s32.totalorder %s32, 0
      %p133 = por %p131, %p132
      %p134 = scmp.le.s32.totalorder 1, %s26
      %p135 = scmp.lt.s32.totalorder %s26, 3
      %p136 = pnand %p134, %p135
      %p137 = pneg %p136
      // Predicated region
      $region9: #{tpu_custom_call.1} parent=5 // pred_check
        _
      $region10: #{tpu_custom_call.1} parent=5 // pred_check_branch
        %139 = sbr.rel (%p136) target = $region12
      $region11: #{tpu_custom_call.1} parent=5 // pred_region
        %s140 = ssub.s32 %s26, 1
      $region12: #{tpu_custom_call.1} parent=5 // pred_fallthru
        _
      %p141 = scmp.lt.s32.totalorder %s26, 2
      // Predicated region
      $region13: #{tpu_custom_call.1} parent=5 // pred_check
        %p142 = pneg %p141
      $region14: #{tpu_custom_call.1} parent=5 // pred_check_branch
        %144 = sbr.rel (%p142) target = $region16
      $region15: #{tpu_custom_call.1} parent=5 // pred_region
        // Predicated region
        $region17: #{tpu_custom_call.1} parent=15 // pred_check
          %p145 = pneg %p64
        $region18: #{tpu_custom_call.1} parent=15 // pred_check_branch
          %147 = sbr.rel (%p145) target = $region20
        $region19: #{tpu_custom_call.1} parent=15 // pred_region
          %s148 = sand.u32 %s54, 1
          %s149 = scalar_lea.sflag [#allocation5], %s148
          %s150 = sand.u32 %s54, 1
          %s151 = smul.addr %s150, 8
          %s152 = scalar_lea.vmem [#allocation4], %s151
          %s153 = sld [smem:[#allocation3 + %s33]]
          %155 = vsyncadd %s149, 0
          %s156 = sadd.s32 %s34, %s33
          %s157 = smul.addr %s153, 2
          %s158 = sadd.s32 %s156, %s157
          %s159 = smul.addr %s158, 8
          %s160 = scalar_lea.hbm %s1, %s159
          %s162 = sshll.u32 %s160, 4
          %s163 = int_to_ptr.hbm [resolvable:$true] %s162
          %s164 = sshll.u32 %s152, 4
          %s165 = int_to_ptr.vmem [resolvable:$true] %s164
          %167 = dma.hbm_to_vmem [thread:$0]  %s163, 128, %s165, %s149
        $region20: #{tpu_custom_call.1} parent=15 // pred_fallthru
          _
        // Predicated region
        $region21: #{tpu_custom_call.1} parent=15 // pred_check
          %p168 = pneg %p92
        $region22: #{tpu_custom_call.1} parent=15 // pred_check_branch
          %170 = sbr.rel (%p168) target = $region24
        $region23: #{tpu_custom_call.1} parent=15 // pred_region
          %s171 = sand.u32 %s82, 1
          %s172 = scalar_lea.sflag [#allocation8], %s171
          %s173 = sand.u32 %s82, 1
          %s174 = scalar_lea.vmem [#allocation7], %s173
          %176 = vsyncadd %s172, 0
          %s177 = sadd.s32 %s34, %s33
          %s178 = scalar_lea.hbm %s2, %s177
          %s180 = sshll.u32 %s178, 4
          %s181 = int_to_ptr.hbm [resolvable:$true] %s180
          %s182 = sshll.u32 %s174, 4
          %s183 = int_to_ptr.vmem [resolvable:$true] %s182
          %185 = dma.hbm_to_vmem [thread:$0]  %s181, 16, %s183, %s172
        $region24: #{tpu_custom_call.1} parent=15 // pred_fallthru
          _
      $region16: #{tpu_custom_call.1} parent=5 // pred_fallthru
        _
      %p186 = scmp.le.s32.totalorder 1, %s26
      %p187 = scmp.lt.s32.totalorder %s26, 3
      %p188 = pnand %p186, %p187
      %p189 = pneg %p188
      // Predicated region
      $region25: #{tpu_custom_call.1} parent=5 // pred_check
        _
      $region26: #{tpu_custom_call.1} parent=5 // pred_check_branch
        %191 = sbr.rel (%p188) target = $region28
      $region27: #{tpu_custom_call.1} parent=5 // pred_region
        %s192 = ssub.s32 %s26, 1
        %s193 = sand.u32 %s57, 1
        %s194 = scalar_lea.sflag [#allocation5], %s193
        %s195 = sand.u32 %s57, 1
        %s196 = smul.addr %s195, 8
        %s197 = scalar_lea.vmem [#allocation4], %s196
        // Predicated region
        $region29: #{tpu_custom_call.1} parent=27 // pred_check
          %p198 = pneg %p70
        $region30: #{tpu_custom_call.1} parent=27 // pred_check_branch
          %200 = sbr.rel (%p198) target = $region32
        $region31: #{tpu_custom_call.1} parent=27 // pred_region
          %202 = dma.done %s194, 128
        $region32: #{tpu_custom_call.1} parent=27 // pred_fallthru
          _
        %s203 = sand.u32 %s85, 1
        %s204 = scalar_lea.sflag [#allocation8], %s203
        %s205 = sand.u32 %s85, 1
        %s206 = scalar_lea.vmem [#allocation7], %s205
        // Predicated region
        $region33: #{tpu_custom_call.1} parent=27 // pred_check
          %p207 = pneg %p98
        $region34: #{tpu_custom_call.1} parent=27 // pred_check_branch
          %209 = sbr.rel (%p207) target = $region36
        $region35: #{tpu_custom_call.1} parent=27 // pred_region
          %211 = dma.done %s204, 16
        $region36: #{tpu_custom_call.1} parent=27 // pred_fallthru
          _
        %s212 = sand.u32 %s57, 1
        %s213 = scalar_lea.sflag [#allocation5], %s212
        %s214 = sand.u32 %s57, 1
        %s215 = smul.addr %s214, 8
        %s216 = scalar_lea.vmem [#allocation4], %s215
        %p217 = pneg %p70
        %p218 = pneg %p67
        %s219 = sand.u32 %s85, 1
        %s220 = scalar_lea.sflag [#allocation8], %s219
        %s221 = sand.u32 %s85, 1
        %s222 = scalar_lea.vmem [#allocation7], %s221
        %p223 = pneg %p98
        %p224 = pneg %p95
        %p225 = pneg %p126
        %p226 = pneg %p123
        %s227 = sand.u32 %s113, 1
        %s228 = scalar_lea.sflag [#allocation6], %s227
        %s229 = sand.u32 %s113, 1
        %s230 = scalar_lea.vmem [#allocation9], %s229
        %s231 = sld [smem:[#allocation3 + %s35]]
        %v232 = vld [vmem:[%s197] sm:$0xff]
        %v233 = vld [vmem:[%s206] sm:$0x1]
        %v234 = vrot.slane %v232, 4
        %v235 = vmax.f32 %v232, %v234
        %v236 = vrot.slane %v235, 2
        %v237 = vmax.f32 %v235, %v236
        %v238 = vrot.slane %v237, 1
        %v239 = vmax.f32 %v237, %v238
        %v240 = vsub.f32 %v232, %v239
        %v241 = vmul.f32 %v240, 1.442695
        %v242 = vpow.pop %v241
        %v243 = vrot.slane %v242, 4
        %v244 = vadd.f32 %v242, %v243
        %v245 = vrot.slane %v244, 2
        %v246 = vadd.f32 %v244, %v245
        %v247 = vrot.slane %v246, 1
        %v248 = vadd.f32 %v246, %v247
        %v249 = vlog2.pop %v248
        %v250 = vmul.f32 %v249, 0.6931472
        %v251 = vlaneseq
        %v252 = vshrl.u32 %v251, 7
        %v253 = vperm.slane %v233, 0
        %vm254 = vcmp.eq.s32.totalorder %v252, %v253
        %v255 = vsel %vm254, %v240, 0.0
        %v256 = vrot.slane %v255, 4
        %v257 = vadd.f32 %v255, %v256
        %v258 = vrot.slane %v257, 2
        %v259 = vadd.f32 %v257, %v258
        %v260 = vrot.slane %v259, 1
        %v261 = vadd.f32 %v259, %v260
        %v262 = vsub.f32 %v250, %v261
        %vm263 = vcmask 1040384
        %v264 = vsel %vm263, %v262, 0.0
        %265 = vadd.xlane.f32.xlu0 %v264
        %v266 = vpop.xlane.xlu0 %265
        %v267 = vrot.slane %v266, 4
        %v268 = vadd.f32 %v266, %v267
        %v269 = vrot.slane %v268, 2
        %v270 = vadd.f32 %v268, %v269
        %v271 = vrot.slane %v270, 1
        %v272 = vadd.f32 %v270, %v271
        %s273 = vtos %v272
        %v274 = vstv %s273
        %275 = vst [vmem:[%s230] sm:$0x1] %v274
        %s276 = sand.u32 %s113, 1
        %s277 = scalar_lea.sflag [#allocation6], %s276
        %s278 = sand.u32 %s113, 1
        %s279 = scalar_lea.vmem [#allocation9], %s278
        // Predicated region
        $region37: #{tpu_custom_call.1} parent=27 // pred_check
          %p280 = pneg %p123
        $region38: #{tpu_custom_call.1} parent=27 // pred_check_branch
          %282 = sbr.rel (%p280) target = $region40
        $region39: #{tpu_custom_call.1} parent=27 // pred_region
          %284 = vsyncadd %s277, 0
          %s285 = sadd.s32 %s36, %s35
          %s286 = scalar_lea.hbm %s3, %s285
          %s288 = sshll.u32 %s279, 4
          %s289 = int_to_ptr.vmem [resolvable:$true] %s288
          %s290 = sshll.u32 %s286, 4
          %s291 = int_to_ptr.hbm [resolvable:$true] %s290
          %293 = dma.vmem_to_hbm [thread:$0]  %s289, 16, %s291, %s277
        $region40: #{tpu_custom_call.1} parent=27 // pred_fallthru
          _
      $region28: #{tpu_custom_call.1} parent=5 // pred_fallthru
        _
      %p294 = scmp.le.s32.totalorder 2, %s26
      // Predicated region
      $region41: #{tpu_custom_call.1} parent=5 // pred_check
        %p295 = pneg %p294
      $region42: #{tpu_custom_call.1} parent=5 // pred_check_branch
        %297 = sbr.rel (%p295) target = $region44
      $region43: #{tpu_custom_call.1} parent=5 // pred_region
        %s298 = ssub.s32 %s26, 2
        // Predicated region
        $region45: #{tpu_custom_call.1} parent=43 // pred_check
          %p299 = pneg %p129
        $region46: #{tpu_custom_call.1} parent=43 // pred_check_branch
          %301 = sbr.rel (%p299) target = $region48
        $region47: #{tpu_custom_call.1} parent=43 // pred_region
          %s302 = sand.u32 %s114, 1
          %s303 = scalar_lea.sflag [#allocation6], %s302
          %s304 = sand.u32 %s114, 1
          %s305 = scalar_lea.vmem [#allocation9], %s304
          %307 = dma.done %s303, 16
        $region48: #{tpu_custom_call.1} parent=43 // pred_fallthru
          _
      $region44: #{tpu_custom_call.1} parent=5 // pred_fallthru
        _
    $region6: #{tpu_custom_call.1} parent=1 // loop_footer
      %s30 = sadd.s32 1, %s26
    $region7: #{tpu_custom_call.1} parent=1 // loop_footer_branch
      %25 = sbr.rel target = $region3
    $region8: #{tpu_custom_call.1} parent=1 // loop_exit
      _
    %308 = vsyncpa [#allocation5], 1
    %s309 = scalar_lea.sflag [#allocation5], 1
    %310 = vsyncpa %s309, 1
    %311 = vsyncpa [#allocation8], 1
    %s312 = scalar_lea.sflag [#allocation8], 1
    %313 = vsyncpa %s312, 1
    %314 = vsyncpa [#allocation6], 1
    %s315 = scalar_lea.sflag [#allocation6], 1
    %316 = vsyncpa %s315, 1

</llo_original>
